<compile_context>
chip_gen: v6e
topology: v6e:2x2x1
jax: 0.10.0
libtpu: 0.0.40
codegen_flags: <defaults>
</compile_context>

<pallas_src>
import functools

import jax
import jax.numpy as jnp
import numpy as np
from jax.experimental import pallas as pl
from jax.experimental.pallas import tpu as pltpu

_LANE = 128
_SUBLANE = 8


def _round_up(a: int, b: int) -> int:
    return pl.cdiv(a, b) * b


def mlp_kernel(x_ref, w1_ref, w2_ref, o_ref):
    # x_ref:  [TM, D_in]      (streamed per grid step)
    # w1_ref: [Hp, D_in]      (PyTorch layout, zero-padded H; VMEM-resident)
    # w2_ref: [Dp, Hp]        (PyTorch layout, zero-padded; VMEM-resident)
    # o_ref:  [TM, Dp]        (lane-dense output tile)
    x = x_ref[...]

    # h = x @ w1.T  -> [TM, Hp]   (contract x dim 1 with w1 dim 1; no transpose needed)
    h = jax.lax.dot_general(
        x, w1_ref[...],
        dimension_numbers=(((1,), (1,)), ((), ())),
        preferred_element_type=jnp.float32,
    )
    h = jax.nn.sigmoid(h)  # f32 on the EUP; padded hidden units give 0.5 * 0-weights = 0

    # y = h @ w2.T  -> [TM, Dp]
    y = jax.lax.dot_general(
        h, w2_ref[...],
        dimension_numbers=(((1,), (1,)), ((), ())),
        preferred_element_type=jnp.float32,
    )
    o_ref[...] = y.astype(o_ref.dtype)


@functools.partial(jax.jit, static_argnames=("block_m",))
def student_network_forward(x, w1, w2, *, block_m: int = 512):
    """x: [N, D_in]; w1: [H, D_in]; w2: [D_out, H] (PyTorch nn.Linear weight layout)."""
    N, D_in = x.shape
    H = w1.shape[0]
    D_out = w2.shape[0]

    # --- lane-dense padding of the (tiny, resident) weights; math stays exact ---
    Hp = _round_up(max(H, _LANE), _LANE)
    Dp = _round_up(max(D_out, _LANE), _LANE)
    w1p = jnp.pad(w1, ((0, Hp - H), (0, 0)))               # [Hp, D_in]
    w2p = jnp.pad(w2, ((0, Dp - D_out), (0, Hp - H)))      # [Dp, Hp]

    # --- batch tiling: TM rows per grid step, weights resident across the grid ---
    tm = min(block_m, _round_up(N, _SUBLANE))
    Np = _round_up(N, tm)
    xp = jnp.pad(x, ((0, Np - N), (0, 0))) if Np != N else x

    out = pl.pallas_call(
        mlp_kernel,
        out_shape=jax.ShapeDtypeStruct((Np, Dp), x.dtype),
        grid_spec=pltpu.PrefetchScalarGridSpec(
            num_scalar_prefetch=0,
            grid=(Np // tm,),
            in_specs=[
                pl.BlockSpec((tm, D_in), lambda i: (i, 0)),   # streamed activations
                pl.BlockSpec((Hp, D_in), lambda i: (0, 0)),   # resident weight 1
                pl.BlockSpec((Dp, Hp), lambda i: (0, 0)),     # resident weight 2
            ],
            out_specs=pl.BlockSpec((tm, Dp), lambda i: (i, 0)),
        ),
        compiler_params=pltpu.CompilerParams(
            dimension_semantics=("parallel",),
        ),
    )(xp, w1p, w2p)

    return out[:N, :D_out]


def xavier_uniform(key, shape):
    # nn.init.xavier_uniform_ for a Linear weight of shape (fan_out, fan_in)
    fan_out, fan_in = shape
    bound = np.sqrt(6.0 / (fan_in + fan_out))
    return jax.random.uniform(key, shape, dtype=jnp.float32,
                              minval=-bound, maxval=bound)


if __name__ == "__main__":
    # Small shapes consistent with the module: D_in=32, H=32, D_out=16, batch=8.
    N, D_in, H, D_out = 8, 32, 32, 16

    key = jax.random.PRNGKey(0)
    kx, k1, k2 = jax.random.split(key, 3)

    x = jax.random.normal(kx, (N, D_in), dtype=jnp.float32)
    w1 = xavier_uniform(k1, (H, D_in))      # linear1.weight
    w2 = xavier_uniform(k2, (D_out, H))     # linear2.weight

    y = student_network_forward(x, w1, w2)
    y = jax.block_until_ready(y)

    # Reference check in plain JAX.
    y_ref = jax.nn.sigmoid(x @ w1.T) @ w2.T
    np.testing.assert_allclose(np.asarray(y), np.asarray(y_ref), rtol=1e-5, atol=1e-5)

    print("KERNEL_OK")
</pallas_src>

<mosaic_0001>
module attributes {stable_mosaic.version = 11 : i64} {
  func.func @mlp_kernel(%arg0: i32, %arg1: memref<8x32xf32, #tpu.memory_space<vmem>>, %arg2: memref<128x32xf32, #tpu.memory_space<vmem>>, %arg3: memref<128x128xf32, #tpu.memory_space<vmem>>, %arg4: memref<8x128xf32, #tpu.memory_space<vmem>>) attributes {dimension_semantics = [#tpu.dimension_semantics<parallel>], iteration_bounds = array<i64: 1>, scalar_prefetch = 0 : i64, scratch_operands = 0 : i64, tpu.core_type = #tpu.core_type<tc>, window_params = [{transform_indices = @transform_0, window_bounds = array<i64: 8, 32>}, {pipeline_mode = #tpu.pipeline_mode<synchronous>, transform_indices = @transform_1, window_bounds = array<i64: 128, 32>}, {pipeline_mode = #tpu.pipeline_mode<synchronous>, transform_indices = @transform_2, window_bounds = array<i64: 128, 128>}, {transform_indices = @transform_3, window_bounds = array<i64: 8, 128>}]} {
    %c0 = arith.constant 0 : index
    %c0_0 = arith.constant 0 : index
    %0 = vector.load %arg1[%c0, %c0_0] : memref<8x32xf32, #tpu.memory_space<vmem>>, vector<8x32xf32>
    %c0_1 = arith.constant 0 : index
    %c0_2 = arith.constant 0 : index
    %1 = vector.load %arg2[%c0_1, %c0_2] : memref<128x32xf32, #tpu.memory_space<vmem>>, vector<128x32xf32>
    %cst = arith.constant dense<0.000000e+00> : vector<8x128xf32>
    %2 = tpu.matmul %0, %1, %cst {dimension_numbers = #tpu.dot_dimension_numbers<[1], [1], [0], [0], [0, 0, 1, 0], [], []>} : vector<8x32xf32>, vector<128x32xf32>, vector<8x128xf32> -> vector<8x128xf32>
    %3 = arith.negf %2 : vector<8x128xf32>
    %4 = math.exp %3 : vector<8x128xf32>
    %cst_3 = arith.constant 1.000000e+00 : f32
    %5 = vector.broadcast %cst_3 : f32 to vector<8x128xf32>
    %6 = arith.addf %5, %4 : vector<8x128xf32>
    %7 = arith.divf %5, %6 : vector<8x128xf32>
    %c0_4 = arith.constant 0 : index
    %c0_5 = arith.constant 0 : index
    %8 = vector.load %arg3[%c0_4, %c0_5] : memref<128x128xf32, #tpu.memory_space<vmem>>, vector<128x128xf32>
    %cst_6 = arith.constant dense<0.000000e+00> : vector<8x128xf32>
    %9 = tpu.matmul %7, %8, %cst_6 {dimension_numbers = #tpu.dot_dimension_numbers<[1], [1], [0], [0], [0, 0, 1, 0], [], []>} : vector<8x128xf32>, vector<128x128xf32>, vector<8x128xf32> -> vector<8x128xf32>
    %c0_7 = arith.constant 0 : index
    %c0_8 = arith.constant 0 : index
    %10 = vector.load %arg4[%c0_7, %c0_8] : memref<8x128xf32, #tpu.memory_space<vmem>>, vector<8x128xf32>
    tpu.vector_store %arg4[%c0_7, %c0_8], %9 {strides = array<i32>} : memref<8x128xf32, #tpu.memory_space<vmem>>, vector<8x128xf32>,
    return
  }
  func.func @transform_0(%arg0: i32) -> (i32, i32) {
    %c0_i32 = arith.constant 0 : i32
    %c0_i32_0 = arith.constant 0 : i32
    return %arg0, %c0_i32 : i32, i32
  }
  func.func @transform_1(%arg0: i32) -> (i32, i32) {
    %c0_i32 = arith.constant 0 : i32
    %c0_i32_0 = arith.constant 0 : i32
    %c0_i32_1 = arith.constant 0 : i32
    return %c0_i32, %c0_i32_0 : i32, i32
  }
  func.func @transform_2(%arg0: i32) -> (i32, i32) {
    %c0_i32 = arith.constant 0 : i32
    %c0_i32_0 = arith.constant 0 : i32
    %c0_i32_1 = arith.constant 0 : i32
    return %c0_i32, %c0_i32_0 : i32, i32
  }
  func.func @transform_3(%arg0: i32) -> (i32, i32) {
    %c0_i32 = arith.constant 0 : i32
    %c0_i32_0 = arith.constant 0 : i32
    return %arg0, %c0_i32 : i32, i32
  }
}

</mosaic_0001>

<llo_original>
// kernel: student_network_forward.1
$region0: #{student_network_forward.1}
  #allocation0 [shape = 'u32[]', space=smem, size = 0x4, offset = 0x4, fixed_abs, tag = 'smem constant byte address 0x4 - core index']
  #allocation1 [shape = 'u32[144,128]{1,0:T(1,128)}', space=vmem, size = 0x12000, scoped, tag = 'internal scratch']
  %s0 = inlined_call_operand.vmem [shape: f32[8,32], index: 0, kind: input, shape index: {}]
  %s1 = inlined_call_operand.vmem [shape: f32[128,32], index: 1, kind: input, shape index: {}]
  %s2 = inlined_call_operand.vmem [shape: f32[128,128], index: 2, kind: input, shape index: {}]
  %s3 = inlined_call_operand.hbm [shape: f32[8,128], index: 3, kind: output, shape index: {}]
  %s4 = sld [smem:[#allocation0]]
  $region22: #{student_network_forward.1} parent=0
    _
  %s6 = ssub.s32 1, %s4
  %s7 = scalar_select 0, %s6, %s4
  $region1: #{student_network_forward.1} parent=0
    #allocation2 [shape = 'u8[4096]{0}', space=vmem, size = 0x1000, scoped, tag = 'output window, operand 0, single buffered']
    #allocation3 [shape = 's32[1]{0}', space=sflag, size = 0x4, scoped, tag = 'scoped memory for student_network_forward.1']
    %8 = vsyncpa [#allocation3], 0
    // Predicated region
    $region2: #{student_network_forward.1} parent=1 // pred_check
      _
    $region3: #{student_network_forward.1} parent=1 // pred_check_branch
      %10 = sbr.rel (0) target = $region5
    $region4: #{student_network_forward.1} parent=1 // pred_region
      _
    $region5: #{student_network_forward.1} parent=1 // pred_fallthru
      _
    // Predicated region
    $region6: #{student_network_forward.1} parent=1 // pred_check
      _
    $region7: #{student_network_forward.1} parent=1 // pred_check_branch
      %12 = sbr.rel (0) target = $region9
    $region8: #{student_network_forward.1} parent=1 // pred_region
      _
    $region9: #{student_network_forward.1} parent=1 // pred_fallthru
      _
    // Predicated region
    $region10: #{student_network_forward.1} parent=1 // pred_check
      _
    $region11: #{student_network_forward.1} parent=1 // pred_check_branch
      %14 = sbr.rel (0) target = $region13
    $region12: #{student_network_forward.1} parent=1 // pred_region
      _
    $region13: #{student_network_forward.1} parent=1 // pred_fallthru
      _
    %v15 = vld [vmem:[%s0] sm:$0xff]
    %v16 = vld [vmem:[%s1] sm:$0xff]
    %v17 = vld [vmem:[%s1 + $0x8] sm:$0xff]
    %v18 = vld [vmem:[%s1 + $0x10] sm:$0xff]
    %v19 = vld [vmem:[%s1 + $0x18] sm:$0xff]
    %v20 = vld [vmem:[%s1 + $0x20] sm:$0xff]
    %v21 = vld [vmem:[%s1 + $0x28] sm:$0xff]
    %v22 = vld [vmem:[%s1 + $0x30] sm:$0xff]
    %v23 = vld [vmem:[%s1 + $0x38] sm:$0xff]
    %v24 = vld [vmem:[%s1 + $0x40] sm:$0xff]
    %v25 = vld [vmem:[%s1 + $0x48] sm:$0xff]
    %v26 = vld [vmem:[%s1 + $0x50] sm:$0xff]
    %v27 = vld [vmem:[%s1 + $0x58] sm:$0xff]
    %v28 = vld [vmem:[%s1 + $0x60] sm:$0xff]
    %v29 = vld [vmem:[%s1 + $0x68] sm:$0xff]
    %v30 = vld [vmem:[%s1 + $0x70] sm:$0xff]
    %v31 = vld [vmem:[%s1 + $0x78] sm:$0xff]
    %vm32 = vcmask 261120
    %v34 = vsel %vm32, %v15, 0
    %v37 = vsel %vm32, %v16, 0
    %v40 = vsel %vm32, %v17, 0
    %v43 = vsel %vm32, %v18, 0
    %v46 = vsel %vm32, %v19, 0
    %v49 = vsel %vm32, %v20, 0
    %v52 = vsel %vm32, %v21, 0
    %v55 = vsel %vm32, %v22, 0
    %v58 = vsel %vm32, %v23, 0
    %v61 = vsel %vm32, %v24, 0
    %v64 = vsel %vm32, %v25, 0
    %v67 = vsel %vm32, %v26, 0
    %v70 = vsel %vm32, %v27, 0
    %v73 = vsel %vm32, %v28, 0
    %v76 = vsel %vm32, %v29, 0
    %v79 = vsel %vm32, %v30, 0
    %v82 = vsel %vm32, %v31, 0
    %84 = vmatprep.subr.mxu0 0.0
    %85 = vmatpush1.xpose.msra.mxu0 %v82
    %86 = vmatprep.subr.mxu0 0.0
    %87 = vmatpush1.xpose.msra.mxu0 %v79
    %88 = vmatprep.subr.mxu0 0.0
    %89 = vmatpush1.xpose.msra.mxu0 %v76
    %90 = vmatprep.subr.mxu0 0.0
    %91 = vmatpush1.xpose.msra.mxu0 %v73
    %92 = vmatprep.subr.mxu0 0.0
    %93 = vmatpush1.xpose.msra.mxu0 %v70
    %94 = vmatprep.subr.mxu0 0.0
    %95 = vmatpush1.xpose.msra.mxu0 %v67
    %96 = vmatprep.subr.mxu0 0.0
    %97 = vmatpush1.xpose.msra.mxu0 %v64
    %98 = vmatprep.subr.mxu0 0.0
    %99 = vmatpush1.xpose.msra.mxu0 %v61
    %100 = vmatprep.subr.mxu0 0.0
    %101 = vmatpush1.xpose.msra.mxu0 %v58
    %102 = vmatprep.subr.mxu0 0.0
    %103 = vmatpush1.xpose.msra.mxu0 %v55
    %104 = vmatprep.subr.mxu0 0.0
    %105 = vmatpush1.xpose.msra.mxu0 %v52
    %106 = vmatprep.subr.mxu0 0.0
    %107 = vmatpush1.xpose.msra.mxu0 %v49
    %108 = vmatprep.subr.mxu0 0.0
    %109 = vmatpush1.xpose.msra.mxu0 %v46
    %110 = vmatprep.subr.mxu0 0.0
    %111 = vmatpush1.xpose.msra.mxu0 %v43
    %112 = vmatprep.subr.mxu0 0.0
    %113 = vmatpush1.xpose.msra.mxu0 %v40
    %114 = vmatprep.subr.mxu0 0.0
    %115 = vmatpush1.xpose.msra.mxu0 %v37
    %116 = vmatprep.subr.mxu0 0.0
    %117 = vmatpush2.xpose.msra.mxu0 0.0
    %118 = vmatprep.subr.mxu0 0.0
    %119 = vmatpush2.xpose.msra.mxu0 0.0
    %120 = vmatprep.subr.mxu0 0.0
    %121 = vmatpush2.xpose.msra.mxu0 0.0
    %122 = vmatprep.subr.mxu0 0.0
    %123 = vmatpush2.xpose.msra.mxu0 0.0
    %124 = vmatprep.subr.mxu0 0.0
    %125 = vmatpush2.xpose.msra.mxu0 0.0
    %126 = vmatprep.subr.mxu0 0.0
    %127 = vmatpush2.xpose.msra.mxu0 0.0
    %128 = vmatprep.subr.mxu0 0.0
    %129 = vmatpush2.xpose.msra.mxu0 0.0
    %130 = vmatprep.subr.mxu0 0.0
    %131 = vmatpush2.xpose.msra.mxu0 0.0
    %132 = vmatprep.subr.mxu0 0.0
    %133 = vmatpush2.xpose.msra.mxu0 0.0
    %134 = vmatprep.subr.mxu0 0.0
    %135 = vmatpush2.xpose.msra.mxu0 0.0
    %136 = vmatprep.subr.mxu0 0.0
    %137 = vmatpush2.xpose.msra.mxu0 0.0
    %138 = vmatprep.subr.mxu0 0.0
    %139 = vmatpush2.xpose.msra.mxu0 0.0
    %140 = vmatprep.subr.mxu0 0.0
    %141 = vmatpush2.xpose.msra.mxu0 0.0
    %142 = vmatprep.subr.mxu0 0.0
    %143 = vmatpush2.xpose.msra.mxu0 0.0
    %144 = vmatprep.subr.mxu0 0.0
    %145 = vmatpush2.xpose.msra.mxu0 0.0
    %146 = vmatprep.subr.mxu0 0.0
    %147 = vmatpush2.xpose.msra.mxu0 0.0
    %148 = vmatprep.mubr.f32.mxu0 0.0
    %149 = vmatmul.mubr.f32.gmra.mxu0 %v34
    %v150 = vpop.f32.mrf.mxu0
    %v151 = vadd.f32 0.0, %v150
    %v152 = vpop.f32.mrf.mxu0
    %153 = vdwg.mxu0
    %v154 = vxor.u32 %v151, 2147483648
    %v155 = vmul.f32 %v154, 1.442695
    %v156 = vpow.pop %v155
    %v157 = vadd.f32 %v156, 1.0
    %v158 = vrcp.pop %v157
    %v159 = vmul.f32 1.0, %v158
    %v160 = vld [vmem:[%s2] sm:$0xff]
    %v161 = vld [vmem:[%s2 + $0x8] sm:$0xff]
    %v162 = vld [vmem:[%s2 + $0x10] sm:$0xff]
    %v163 = vld [vmem:[%s2 + $0x18] sm:$0xff]
    %v164 = vld [vmem:[%s2 + $0x20] sm:$0xff]
    %v165 = vld [vmem:[%s2 + $0x28] sm:$0xff]
    %v166 = vld [vmem:[%s2 + $0x30] sm:$0xff]
    %v167 = vld [vmem:[%s2 + $0x38] sm:$0xff]
    %v168 = vld [vmem:[%s2 + $0x40] sm:$0xff]
    %v169 = vld [vmem:[%s2 + $0x48] sm:$0xff]
    %v170 = vld [vmem:[%s2 + $0x50] sm:$0xff]
    %v171 = vld [vmem:[%s2 + $0x58] sm:$0xff]
    %v172 = vld [vmem:[%s2 + $0x60] sm:$0xff]
    %v173 = vld [vmem:[%s2 + $0x68] sm:$0xff]
    %v174 = vld [vmem:[%s2 + $0x70] sm:$0xff]
    %v175 = vld [vmem:[%s2 + $0x78] sm:$0xff]
    %176 = vmatprep.subr.mxu0 0.0
    %177 = vmatpush1.xpose.msra.mxu0 %v175
    %178 = vmatprep.subr.mxu0 0.0
    %179 = vmatpush1.xpose.msra.mxu0 %v174
    %180 = vmatprep.subr.mxu0 0.0
    %181 = vmatpush1.xpose.msra.mxu0 %v173
    %182 = vmatprep.subr.mxu0 0.0
    %183 = vmatpush1.xpose.msra.mxu0 %v172
    %184 = vmatprep.subr.mxu0 0.0
    %185 = vmatpush1.xpose.msra.mxu0 %v171
    %186 = vmatprep.subr.mxu0 0.0
    %187 = vmatpush1.xpose.msra.mxu0 %v170
    %188 = vmatprep.subr.mxu0 0.0
    %189 = vmatpush1.xpose.msra.mxu0 %v169
    %190 = vmatprep.subr.mxu0 0.0
    %191 = vmatpush1.xpose.msra.mxu0 %v168
    %192 = vmatprep.subr.mxu0 0.0
    %193 = vmatpush1.xpose.msra.mxu0 %v167
    %194 = vmatprep.subr.mxu0 0.0
    %195 = vmatpush1.xpose.msra.mxu0 %v166
    %196 = vmatprep.subr.mxu0 0.0
    %197 = vmatpush1.xpose.msra.mxu0 %v165
    %198 = vmatprep.subr.mxu0 0.0
    %199 = vmatpush1.xpose.msra.mxu0 %v164
    %200 = vmatprep.subr.mxu0 0.0
    %201 = vmatpush1.xpose.msra.mxu0 %v163
    %202 = vmatprep.subr.mxu0 0.0
    %203 = vmatpush1.xpose.msra.mxu0 %v162
    %204 = vmatprep.subr.mxu0 0.0
    %205 = vmatpush1.xpose.msra.mxu0 %v161
    %206 = vmatprep.subr.mxu0 0.0
    %207 = vmatpush1.xpose.msra.mxu0 %v160
    %208 = vmatprep.subr.mxu0 0.0
    %209 = vmatpush2.xpose.msra.mxu0 0.0
    %210 = vmatprep.subr.mxu0 0.0
    %211 = vmatpush2.xpose.msra.mxu0 0.0
    %212 = vmatprep.subr.mxu0 0.0
    %213 = vmatpush2.xpose.msra.mxu0 0.0
    %214 = vmatprep.subr.mxu0 0.0
    %215 = vmatpush2.xpose.msra.mxu0 0.0
    %216 = vmatprep.subr.mxu0 0.0
    %217 = vmatpush2.xpose.msra.mxu0 0.0
    %218 = vmatprep.subr.mxu0 0.0
    %219 = vmatpush2.xpose.msra.mxu0 0.0
    %220 = vmatprep.subr.mxu0 0.0
    %221 = vmatpush2.xpose.msra.mxu0 0.0
    %222 = vmatprep.subr.mxu0 0.0
    %223 = vmatpush2.xpose.msra.mxu0 0.0
    %224 = vmatprep.subr.mxu0 0.0
    %225 = vmatpush2.xpose.msra.mxu0 0.0
    %226 = vmatprep.subr.mxu0 0.0
    %227 = vmatpush2.xpose.msra.mxu0 0.0
    %228 = vmatprep.subr.mxu0 0.0
    %229 = vmatpush2.xpose.msra.mxu0 0.0
    %230 = vmatprep.subr.mxu0 0.0
    %231 = vmatpush2.xpose.msra.mxu0 0.0
    %232 = vmatprep.subr.mxu0 0.0
    %233 = vmatpush2.xpose.msra.mxu0 0.0
    %234 = vmatprep.subr.mxu0 0.0
    %235 = vmatpush2.xpose.msra.mxu0 0.0
    %236 = vmatprep.subr.mxu0 0.0
    %237 = vmatpush2.xpose.msra.mxu0 0.0
    %238 = vmatprep.subr.mxu0 0.0
    %239 = vmatpush2.xpose.msra.mxu0 0.0
    %240 = vmatprep.mubr.f32.mxu0 0.0
    %241 = vmatmul.mubr.f32.gmra.mxu0 %v159
    %v242 = vpop.f32.mrf.mxu0
    %v243 = vadd.f32 0.0, %v242
    %v244 = vpop.f32.mrf.mxu0
    %245 = vdwg.mxu0
    %246 = vst [vmem:[#allocation2] sm:$0xff] %v243
    // Predicated region
    $region14: #{student_network_forward.1} parent=1 // pred_check
      _
    $region15: #{student_network_forward.1} parent=1 // pred_check_branch
      %248 = sbr.rel (0) target = $region17
    $region16: #{student_network_forward.1} parent=1 // pred_region
      %s250 = ssub.s32 128, 128
      %251 = vsyncadd [#allocation3], %s250
      %s253 = sshll.u32 [#allocation2], 4
      %s254 = int_to_ptr.vmem [resolvable:$true] %s253
      %256 = dma.vmem_to_hbm [thread:$0]  %s254, 128, %s3, [#allocation3]
    $region17: #{student_network_forward.1} parent=1 // pred_fallthru
      _
    // Predicated region
    $region18: #{student_network_forward.1} parent=1 // pred_check
      _
    $region19: #{student_network_forward.1} parent=1 // pred_check_branch
      %258 = sbr.rel (0) target = $region21
    $region20: #{student_network_forward.1} parent=1 // pred_region
      %259 = dma.done [#allocation3], 128
    $region21: #{student_network_forward.1} parent=1 // pred_fallthru
      _
    %260 = vsyncpa [#allocation3], 1

</llo_original>
